<compile_context>
chip_gen: v5e
topology: v5e:2x2
jax: 0.10.0
libtpu: 0.0.40
codegen_flags: <defaults>
</compile_context>

<pallas_src>
import functools
import math

import jax
import jax.numpy as jnp
from jax import lax
from jax.experimental import pallas as pl
from jax.experimental.pallas import tpu as pltpu


def cefn_kernel(x_ref, dw_ref, ones_ref, scal_ref, out_ref, *, H, W, HW, eps):
    """One (Rb, L) row slab per grid step.

    Each row is one (sample, channel-group); the L-lane axis packs P = L // HW
    whole channels, each a contiguous HW-lane segment laid out as f = h*W + w.
    """
    L = x_ref.shape[-1]

    x = x_ref[...].astype(jnp.float32)            # (Rb, L)
    res = x

    # Segment-local lane helpers (computed once, broadcast over rows).
    lane = lax.broadcasted_iota(jnp.int32, (1, L), 1)
    f = lane % HW                                  # flat spatial index inside a segment
    is_even = (f & 1) == 0                         # w == 0
    is_odd = jnp.logical_not(is_even)              # w == 1
    h_up_ok = f >= W                               # h - 1 >= 0
    h_dn_ok = f < (H - 1) * W                      # h + 1 <= H - 1

    ones_blk = ones_ref[...]                       # (L, L) block-diagonal (HW x HW of ones)
    inv_hw = 1.0 / HW

    def seg_sum(v):
        # Per-(row, channel-segment) sum broadcast back to every lane of the
        # segment: one matmul on the otherwise-idle MXU.
        return jnp.dot(v, ones_blk, preferred_element_type=jnp.float32)

    def inorm(v):
        # InstanceNorm2d (biased variance, no affine); two-pass / centered
        # variance to avoid E[x^2] - mean^2 cancellation.
        m = seg_sum(v) * inv_hw
        d = v - m
        var = seg_sum(d * d) * inv_hw
        return d * lax.rsqrt(var + eps)

    def partner(v):
        # The other element of each (w=0, w=1) lane pair via XLU rotations.
        # Never crosses a channel segment (even lanes look +1, odd lanes -1).
        nxt = pltpu.roll(v, shift=L - 1, axis=1)   # nxt[l] = v[l + 1]
        prv = pltpu.roll(v, shift=1, axis=1)       # prv[l] = v[l - 1]
        return jnp.where(is_even, nxt, prv)

    def pair_linear(v, base):
        # nn.Linear over the last spatial dim (W == 2), lowered to VPU MACs.
        w00 = scal_ref[base + 0]
        w01 = scal_ref[base + 1]
        w10 = scal_ref[base + 2]
        w11 = scal_ref[base + 3]
        b0 = scal_ref[base + 4]
        b1 = scal_ref[base + 5]
        p = partner(v)
        c_self = jnp.where(is_even, w00, w11)
        c_part = jnp.where(is_even, w01, w10)
        bias = jnp.where(is_even, b0, b1)
        return v * c_self + p * c_part + bias

    # ---- InstanceNorm2d #1 + Linear #1 ----
    y = inorm(x)
    y = pair_linear(y, 0)

    # ---- Depthwise 3x3 conv, stride 1, zero padding 1 ----
    # Unique nonzero lane offsets dy*W + dx; +-1 each serve two taps, so only
    # 6 rolls are issued (XLU) instead of 8.
    shifted = {
        off: pltpu.roll(y, shift=(-off) % L, axis=1)   # shifted[l] = y[l + off]
        for off in (-3, -2, -1, 1, 2, 3)
    }
    acc = y * dw_ref[4]                             # centre tap (dy=0, dx=0)
    tap = 0
    for dy in (-1, 0, 1):
        for dx in (-1, 0, 1):
            if dy == 0 and dx == 0:
                tap += 1
                continue
            m = None
            if dy == -1:
                m = h_up_ok
            elif dy == 1:
                m = h_dn_ok
            if dx == -1:
                m = is_odd if m is None else jnp.logical_and(m, is_odd)
            elif dx == 1:
                m = is_even if m is None else jnp.logical_and(m, is_even)
            # The boundary mask also guarantees the rolled value never comes
            # from a neighbouring channel segment (f + off stays in [0, HW)).
            acc = acc + jnp.where(m, shifted[dy * W + dx], 0.0) * dw_ref[tap]
            tap += 1
    y = acc + dw_ref[9]                             # per-channel conv bias

    # ---- ReLU + Linear #2 + InstanceNorm #2 ----
    y = jnp.maximum(y, 0.0)
    y = pair_linear(y, 6)
    y = inorm(y)

    # ---- AvgPool(1, 2) + gating MLP (small_shape == 1) + sigmoid ----
    pooled = 0.5 * (y + partner(y))                 # pooled value on both lanes of a pair
    g = pooled * scal_ref[12] + scal_ref[13]        # Linear3 (1x1)
    g = jnp.maximum(g, 0.0)
    g = g * scal_ref[14] + scal_ref[15]             # Linear4 (1x1)
    g = jax.nn.sigmoid(g)

    # ---- Gate * y + residual: one lane-dense store of the whole slab ----
    out_ref[...] = (y * g + res).astype(out_ref.dtype)


def cefn_forward(x, params, pool_kernel, pool_stride):
    N, C, H, W = x.shape
    kh, kw = pool_kernel
    assert tuple(pool_kernel) == tuple(pool_stride), "kernel assumes kernel == stride"
    # torch.mul broadcast / nn.Linear constraints: flat(shape) == W == 2, small_shape == 1.
    assert W == 2 and kh == 1 and kw == 2, "kernel specialized to flat shape == 2, small_shape == 1"
    assert params["w1"].shape == (W, W) and params["w3"].shape == (1, 1)

    HW = H * W
    LANES = 128

    # ---- Lane-dense packing: put P whole channels on the 128-lane axis ----
    P = math.gcd(C, LANES // HW) if (HW <= LANES and LANES % HW == 0) else 1
    CG = C // P                       # channel groups per sample (rows per sample)
    L = P * HW                        # lane width (128 for the toy shapes)

    R = N * CG                        # total rows
    # Row block: a multiple of CG (so the per-lane conv taps tile cleanly) and
    # of 8 (full sublane tiles / MXU-friendly M), capped at ~512 rows per step.
    base = CG * 8 // math.gcd(CG, 8)              # lcm(CG, 8)
    cap = max(base, (512 // base) * base)
    Rb = min(pl.cdiv(R, base) * base, cap)
    R_pad = pl.cdiv(R, Rb) * Rb
    grid_steps = R_pad // Rb

    x_rows = x.reshape(R, L)
    if R_pad != R:
        x_rows = jnp.pad(x_rows, ((0, R_pad - R), (0, 0)))

    # ---- Consolidated parameter blocks ----
    # Depthwise conv taps + bias, expanded to one value per lane (per segment).
    dw_all = jnp.concatenate(
        [params["dw_w"].reshape(C, 9), params["dw_b"].reshape(C, 1)], axis=1
    ).astype(jnp.float32)                                          # (C, 10)
    dw_lane = jnp.repeat(dw_all.reshape(CG, P, 10), HW, axis=1)    # (CG, L, 10)
    dw_lane = jnp.transpose(dw_lane, (2, 0, 1))                    # (10, CG, L)
    dw_lane = jnp.tile(dw_lane, (1, Rb // CG, 1))                  # (10, Rb, L); row r -> group r % CG

    # Block-diagonal ones matrix: per-segment InstanceNorm sums as MXU matmuls.
    seg = jnp.arange(L, dtype=jnp.int32) // HW
    ones_blk = (seg[:, None] == seg[None, :]).astype(jnp.float32)  # (L, L)

    # All Linear weights/biases as 16 scalars in SMEM (whole array, fetched once).
    scal = jnp.concatenate([
        params["w1"].reshape(-1), params["b1"].reshape(-1),   # 0..3, 4..5
        params["w2"].reshape(-1), params["b2"].reshape(-1),   # 6..9, 10..11
        params["w3"].reshape(-1), params["b3"].reshape(-1),   # 12, 13
        params["w4"].reshape(-1), params["b4"].reshape(-1),   # 14, 15
    ]).astype(jnp.float32)

    kernel = functools.partial(cefn_kernel, H=H, W=W, HW=HW, eps=1e-5)

    # VMEM budget: x/out double-buffered, invariant operands single-buffered.
    # Capped at 48 MiB so the same tiling fits v7x's 64 MiB VMEM with headroom.
    vmem_needed = 4 * (2 * 2 * Rb * L + 10 * Rb * L + L * L)
    vmem_limit = int(min(48 * 2**20, max(8 * 2**20, 4 * vmem_needed)))

    out_rows = pl.pallas_call(
        kernel,
        out_shape=jax.ShapeDtypeStruct((R_pad, L), x.dtype),
        grid=(grid_steps,),
        in_specs=[
            pl.BlockSpec((Rb, L), lambda r: (r, 0)),
            # Invariant operands: constant index_map + a single revolving buffer.
            pl.BlockSpec((10, Rb, L), lambda r: (0, 0, 0), pipeline_mode=pl.Buffered(1)),
            pl.BlockSpec((L, L), lambda r: (0, 0), pipeline_mode=pl.Buffered(1)),
            pl.BlockSpec(memory_space=pltpu.MemorySpace.SMEM),
        ],
        out_specs=pl.BlockSpec((Rb, L), lambda r: (r, 0)),
        compiler_params=pltpu.CompilerParams(
            # v7x shards a "parallel" grid across 2 TensorCores; only mark it
            # parallel when there is more than one step.
            dimension_semantics=("parallel",) if grid_steps > 1 else ("arbitrary",),
            vmem_limit_bytes=vmem_limit,
        ),
    )(x_rows, dw_lane, ones_blk, scal)

    return out_rows[:R].reshape(N, C, H, W)


def init_params(key, feat, S, S2):
    keys = jax.random.split(key, 10)

    def unif(k, shape, fan_in):
        b = 1.0 / math.sqrt(fan_in)
        return jax.random.uniform(k, shape, jnp.float32, -b, b)

    return dict(
        w1=unif(keys[0], (S, S), S), b1=unif(keys[1], (S,), S),
        dw_w=unif(keys[2], (feat, 3, 3), 9), dw_b=unif(keys[3], (feat,), 9),
        w2=unif(keys[4], (S, S), S), b2=unif(keys[5], (S,), S),
        w3=unif(keys[6], (S2, S2), S2), b3=unif(keys[7], (S2,), S2),
        w4=unif(keys[8], (S2, S2), S2), b4=unif(keys[9], (S2,), S2),
    )


def cefn_reference(x, params, pool_kernel, pool_stride):
    """Pure-JAX reference mirroring the PyTorch forward (for validation)."""
    eps = 1e-5
    N, C, H, W = x.shape
    kh, kw = pool_kernel

    def inorm(v):
        m = v.mean(axis=(2, 3), keepdims=True)
        var = ((v - m) ** 2).mean(axis=(2, 3), keepdims=True)
        return (v - m) / jnp.sqrt(var + eps)

    res = x
    y = inorm(x)
    y = y @ params["w1"].T + params["b1"]
    y = lax.conv_general_dilated(
        y, params["dw_w"][:, None, :, :], (1, 1), ((1, 1), (1, 1)),
        dimension_numbers=("NCHW", "OIHW", "NCHW"), feature_group_count=C)
    y = y + params["dw_b"][None, :, None, None]
    y = jnp.maximum(y, 0.0)
    y = y @ params["w2"].T + params["b2"]
    y = inorm(y)
    y2 = y.reshape(N, C, H // kh, kh, W // kw, kw).mean(axis=(3, 5))
    y2 = y2 @ params["w3"].T + params["b3"]
    y2 = jnp.maximum(y2, 0.0)
    y2 = y2 @ params["w4"].T + params["b4"]
    y2 = jax.nn.sigmoid(y2)
    return y * y2 + res


if __name__ == "__main__":
    # CEFN(feat=4, pool_kernel=(1, 2), pool_stride=(1, 2), shape=(1, 1, 2))
    #   -> flat shape = 2, small_shape = 1   (see layout note at top of file)
    batch, feat, H, W = 2, 4, 16, 2
    pool_kernel = (1, 2)
    pool_stride = (1, 2)
    S, S2 = W, W // pool_kernel[1]

    key = jax.random.PRNGKey(0)
    kx, kp = jax.random.split(key)
    x = jax.random.normal(kx, (batch, feat, H, W), jnp.float32)
    params = init_params(kp, feat, S, S2)

    fwd = jax.jit(lambda xx: cefn_forward(xx, params, pool_kernel, pool_stride))
    out = jax.block_until_ready(fwd(x))

    ref = cefn_reference(x, params, pool_kernel, pool_stride)
    assert out.shape == x.shape and out.dtype == x.dtype
    err = float(jnp.max(jnp.abs(out - ref)))
    assert jnp.allclose(out, ref, rtol=1e-4, atol=1e-4), err
    print("KERNEL_OK")
</pallas_src>

<mosaic_0001>
module attributes {stable_mosaic.version = 11 : i64} {
  func.func @cefn_kernel(%arg0: i32, %arg1: memref<8x128xf32, #tpu.memory_space<vmem>>, %arg2: memref<10x8x128xf32, #tpu.memory_space<vmem>>, %arg3: memref<128x128xf32, #tpu.memory_space<vmem>>, %arg4: memref<16xf32, #tpu.memory_space<smem>>, %arg5: memref<8x128xf32, #tpu.memory_space<vmem>>) attributes {dimension_semantics = [#tpu.dimension_semantics<arbitrary>], iteration_bounds = array<i64: 1>, scalar_prefetch = 0 : i64, scratch_operands = 0 : i64, tpu.core_type = #tpu.core_type<tc>, window_params = [{transform_indices = @transform_0, window_bounds = array<i64: 8, 128>}, {pipeline_mode = #tpu.pipeline_mode<synchronous>, transform_indices = @transform_1, window_bounds = array<i64: 10, 8, 128>}, {pipeline_mode = #tpu.pipeline_mode<synchronous>, transform_indices = @transform_2, window_bounds = array<i64: 128, 128>}, {transform_indices = @transform_3, window_bounds = array<i64: 16>}, {transform_indices = @transform_4, window_bounds = array<i64: 8, 128>}]} {
    %c0 = arith.constant 0 : index
    %c0_0 = arith.constant 0 : index
    %0 = vector.load %arg1[%c0, %c0_0] : memref<8x128xf32, #tpu.memory_space<vmem>>, vector<8x128xf32>
    %1 = tpu.iota {dimensions = array<i32: 1>} : vector<1x128xi32>
    %c32_i32 = arith.constant 32 : i32
    %c0_i32 = arith.constant 0 : i32
    %2 = arith.cmpi eq, %c32_i32, %c0_i32 : i32
    %c1_i32 = arith.constant 1 : i32
    %3 = arith.select %2, %c1_i32, %c32_i32 : i32
    %4 = vector.broadcast %3 : i32 to vector<1x128xi32>
    %5 = arith.remsi %1, %4 : vector<1x128xi32>
    %c0_i32_1 = arith.constant 0 : i32
    %6 = vector.broadcast %c0_i32_1 : i32 to vector<1x128xi32>
    %7 = arith.cmpi ne, %5, %6 : vector<1x128xi32>
    %c0_i32_2 = arith.constant 0 : i32
    %8 = vector.broadcast %c0_i32_2 : i32 to vector<1x128xi32>
    %9 = arith.cmpi slt, %5, %8 : vector<1x128xi32>
    %c0_i32_3 = arith.constant 0 : i32
    %10 = arith.cmpi slt, %3, %c0_i32_3 : i32
    %11 = vector.broadcast %10 : i1 to vector<1x128xi1>
    %12 = vector.broadcast %11 : vector<1x128xi1> to vector<1x128xi1>
    %13 = arith.xori %9, %12 : vector<1x128xi1>
    %14 = arith.andi %13, %7 : vector<1x128xi1>
    %15 = vector.broadcast %3 : i32 to vector<1x128xi32>
    %16 = arith.addi %5, %15 : vector<1x128xi32>
    %17 = arith.select %14, %16, %5 : vector<1x128xi1>, vector<1x128xi32>
    %c1_i32_4 = arith.constant 1 : i32
    %18 = vector.broadcast %c1_i32_4 : i32 to vector<1x128xi32>
    %19 = arith.andi %17, %18 : vector<1x128xi32>
    %c0_i32_5 = arith.constant 0 : i32
    %20 = vector.broadcast %c0_i32_5 : i32 to vector<1x128xi32>
    %21 = arith.cmpi eq, %19, %20 : vector<1x128xi32>
    %cst = arith.constant dense<true> : vector<1x128xi1>
    %22 = arith.xori %21, %cst : vector<1x128xi1>
    %c2_i32 = arith.constant 2 : i32
    %23 = vector.broadcast %c2_i32 : i32 to vector<1x128xi32>
    %24 = arith.cmpi sge, %17, %23 : vector<1x128xi32>
    %c30_i32 = arith.constant 30 : i32
    %25 = vector.broadcast %c30_i32 : i32 to vector<1x128xi32>
    %26 = arith.cmpi slt, %17, %25 : vector<1x128xi32>
    %c0_6 = arith.constant 0 : index
    %c0_7 = arith.constant 0 : index
    %27 = vector.load %arg3[%c0_6, %c0_7] : memref<128x128xf32, #tpu.memory_space<vmem>>, vector<128x128xf32>
    %cst_8 = arith.constant dense<0.000000e+00> : vector<8x128xf32>
    %28 = tpu.matmul %0, %27, %cst_8 {dimension_numbers = #tpu.dot_dimension_numbers<[1], [0], [0], [1], [0, 0, 1, 1], [], []>} : vector<8x128xf32>, vector<128x128xf32>, vector<8x128xf32> -> vector<8x128xf32>
    %cst_9 = arith.constant 3.125000e-02 : f32
    %29 = vector.broadcast %cst_9 : f32 to vector<8x128xf32>
    %30 = arith.mulf %28, %29 : vector<8x128xf32>
    %31 = arith.subf %0, %30 : vector<8x128xf32>
    %32 = arith.mulf %31, %31 : vector<8x128xf32>
    %cst_10 = arith.constant dense<0.000000e+00> : vector<8x128xf32>
    %33 = tpu.matmul %32, %27, %cst_10 {dimension_numbers = #tpu.dot_dimension_numbers<[1], [0], [0], [1], [0, 0, 1, 1], [], []>} : vector<8x128xf32>, vector<128x128xf32>, vector<8x128xf32> -> vector<8x128xf32>
    %cst_11 = arith.constant 3.125000e-02 : f32
    %34 = vector.broadcast %cst_11 : f32 to vector<8x128xf32>
    %35 = arith.mulf %33, %34 : vector<8x128xf32>
    %cst_12 = arith.constant 9.99999974E-6 : f32
    %36 = vector.broadcast %cst_12 : f32 to vector<8x128xf32>
    %37 = arith.addf %35, %36 : vector<8x128xf32>
    %38 = math.rsqrt %37 : vector<8x128xf32>
    %39 = arith.mulf %31, %38 : vector<8x128xf32>
    %c0_13 = arith.constant 0 : index
    %40 = memref.load %arg4[%c0_13] : memref<16xf32, #tpu.memory_space<smem>>
    %c1 = arith.constant 1 : index
    %41 = memref.load %arg4[%c1] : memref<16xf32, #tpu.memory_space<smem>>
    %c2 = arith.constant 2 : index
    %42 = memref.load %arg4[%c2] : memref<16xf32, #tpu.memory_space<smem>>
    %c3 = arith.constant 3 : index
    %43 = memref.load %arg4[%c3] : memref<16xf32, #tpu.memory_space<smem>>
    %c4 = arith.constant 4 : index
    %44 = memref.load %arg4[%c4] : memref<16xf32, #tpu.memory_space<smem>>
    %c5 = arith.constant 5 : index
    %45 = memref.load %arg4[%c5] : memref<16xf32, #tpu.memory_space<smem>>
    %c127_i32 = arith.constant 127 : i32
    %46 = tpu.dynamic_rotate %39 by %c127_i32 dim 1 : vector<8x128xf32>, i32 -> vector<8x128xf32>
    %c1_i32_14 = arith.constant 1 : i32
    %47 = tpu.dynamic_rotate %39 by %c1_i32_14 dim 1 : vector<8x128xf32>, i32 -> vector<8x128xf32>
    %48 = vector.shape_cast %21 : vector<1x128xi1> to vector<1x128xi1>
    %49 = vector.broadcast %48 : vector<1x128xi1> to vector<8x128xi1>
    %50 = arith.select %49, %46, %47 : vector<8x128xi1>, vector<8x128xf32>
    %51 = vector.broadcast %40 : f32 to vector<1x128xf32>
    %52 = vector.broadcast %43 : f32 to vector<1x128xf32>
    %53 = arith.select %21, %51, %52 : vector<1x128xi1>, vector<1x128xf32>
    %54 = vector.broadcast %41 : f32 to vector<1x128xf32>
    %55 = vector.broadcast %42 : f32 to vector<1x128xf32>
    %56 = arith.select %21, %54, %55 : vector<1x128xi1>, vector<1x128xf32>
    %57 = vector.broadcast %44 : f32 to vector<1x128xf32>
    %58 = vector.broadcast %45 : f32 to vector<1x128xf32>
    %59 = arith.select %21, %57, %58 : vector<1x128xi1>, vector<1x128xf32>
    %60 = vector.broadcast %53 : vector<1x128xf32> to vector<8x128xf32>
    %61 = arith.mulf %39, %60 : vector<8x128xf32>
    %62 = vector.broadcast %56 : vector<1x128xf32> to vector<8x128xf32>
    %63 = arith.mulf %50, %62 : vector<8x128xf32>
    %64 = arith.addf %61, %63 : vector<8x128xf32>
    %65 = vector.broadcast %59 : vector<1x128xf32> to vector<8x128xf32>
    %66 = arith.addf %64, %65 : vector<8x128xf32>
    %c3_i32 = arith.constant 3 : i32
    %67 = tpu.dynamic_rotate %66 by %c3_i32 dim 1 : vector<8x128xf32>, i32 -> vector<8x128xf32>
    %c2_i32_15 = arith.constant 2 : i32
    %68 = tpu.dynamic_rotate %66 by %c2_i32_15 dim 1 : vector<8x128xf32>, i32 -> vector<8x128xf32>
    %c1_i32_16 = arith.constant 1 : i32
    %69 = tpu.dynamic_rotate %66 by %c1_i32_16 dim 1 : vector<8x128xf32>, i32 -> vector<8x128xf32>
    %c127_i32_17 = arith.constant 127 : i32
    %70 = tpu.dynamic_rotate %66 by %c127_i32_17 dim 1 : vector<8x128xf32>, i32 -> vector<8x128xf32>
    %c126_i32 = arith.constant 126 : i32
    %71 = tpu.dynamic_rotate %66 by %c126_i32 dim 1 : vector<8x128xf32>, i32 -> vector<8x128xf32>
    %c125_i32 = arith.constant 125 : i32
    %72 = tpu.dynamic_rotate %66 by %c125_i32 dim 1 : vector<8x128xf32>, i32 -> vector<8x128xf32>
    %c4_18 = arith.constant 4 : index
    %c0_19 = arith.constant 0 : index
    %c0_20 = arith.constant 0 : index
    %73 = vector.load %arg2[%c4_18, %c0_19, %c0_20] : memref<10x8x128xf32, #tpu.memory_space<vmem>>, vector<1x8x128xf32>
    %74 = vector.shape_cast %73 : vector<1x8x128xf32> to vector<8x128xf32>
    %75 = arith.mulf %66, %74 : vector<8x128xf32>
    %76 = arith.andi %24, %22 : vector<1x128xi1>
    %cst_21 = arith.constant 0.000000e+00 : f32
    %77 = vector.shape_cast %76 : vector<1x128xi1> to vector<1x128xi1>
    %78 = vector.broadcast %77 : vector<1x128xi1> to vector<8x128xi1>
    %79 = vector.broadcast %cst_21 : f32 to vector<8x128xf32>
    %80 = arith.select %78, %67, %79 : vector<8x128xi1>, vector<8x128xf32>
    %c0_22 = arith.constant 0 : index
    %c0_23 = arith.constant 0 : index
    %c0_24 = arith.constant 0 : index
    %81 = vector.load %arg2[%c0_22, %c0_23, %c0_24] : memref<10x8x128xf32, #tpu.memory_space<vmem>>, vector<1x8x128xf32>
    %82 = vector.shape_cast %81 : vector<1x8x128xf32> to vector<8x128xf32>
    %83 = arith.mulf %80, %82 : vector<8x128xf32>
    %84 = arith.addf %75, %83 : vector<8x128xf32>
    %cst_25 = arith.constant 0.000000e+00 : f32
    %85 = vector.shape_cast %24 : vector<1x128xi1> to vector<1x128xi1>
    %86 = vector.broadcast %85 : vector<1x128xi1> to vector<8x128xi1>
    %87 = vector.broadcast %cst_25 : f32 to vector<8x128xf32>
    %88 = arith.select %86, %68, %87 : vector<8x128xi1>, vector<8x128xf32>
    %c1_26 = arith.constant 1 : index
    %c0_27 = arith.constant 0 : index
    %c0_28 = arith.constant 0 : index
    %89 = vector.load %arg2[%c1_26, %c0_27, %c0_28] : memref<10x8x128xf32, #tpu.memory_space<vmem>>, vector<1x8x128xf32>
    %90 = vector.shape_cast %89 : vector<1x8x128xf32> to vector<8x128xf32>
    %91 = arith.mulf %88, %90 : vector<8x128xf32>
    %92 = arith.addf %84, %91 : vector<8x128xf32>
    %93 = arith.andi %24, %21 : vector<1x128xi1>
    %cst_29 = arith.constant 0.000000e+00 : f32
    %94 = vector.shape_cast %93 : vector<1x128xi1> to vector<1x128xi1>
    %95 = vector.broadcast %94 : vector<1x128xi1> to vector<8x128xi1>
    %96 = vector.broadcast %cst_29 : f32 to vector<8x128xf32>
    %97 = arith.select %95, %69, %96 : vector<8x128xi1>, vector<8x128xf32>
    %c2_30 = arith.constant 2 : index
    %c0_31 = arith.constant 0 : index
    %c0_32 = arith.constant 0 : index
    %98 = vector.load %arg2[%c2_30, %c0_31, %c0_32] : memref<10x8x128xf32, #tpu.memory_space<vmem>>, vector<1x8x128xf32>
    %99 = vector.shape_cast %98 : vector<1x8x128xf32> to vector<8x128xf32>
    %100 = arith.mulf %97, %99 : vector<8x128xf32>
    %101 = arith.addf %92, %100 : vector<8x128xf32>
    %cst_33 = arith.constant 0.000000e+00 : f32
    %102 = vector.shape_cast %22 : vector<1x128xi1> to vector<1x128xi1>
    %103 = vector.broadcast %102 : vector<1x128xi1> to vector<8x128xi1>
    %104 = vector.broadcast %cst_33 : f32 to vector<8x128xf32>
    %105 = arith.select %103, %69, %104 : vector<8x128xi1>, vector<8x128xf32>
    %c3_34 = arith.constant 3 : index
    %c0_35 = arith.constant 0 : index
    %c0_36 = arith.constant 0 : index
    %106 = vector.load %arg2[%c3_34, %c0_35, %c0_36] : memref<10x8x128xf32, #tpu.memory_space<vmem>>, vector<1x8x128xf32>
    %107 = vector.shape_cast %106 : vector<1x8x128xf32> to vector<8x128xf32>
    %108 = arith.mulf %105, %107 : vector<8x128xf32>
    %109 = arith.addf %101, %108 : vector<8x128xf32>
    %cst_37 = arith.constant 0.000000e+00 : f32
    %110 = vector.shape_cast %21 : vector<1x128xi1> to vector<1x128xi1>
    %111 = vector.broadcast %110 : vector<1x128xi1> to vector<8x128xi1>
    %112 = vector.broadcast %cst_37 : f32 to vector<8x128xf32>
    %113 = arith.select %111, %70, %112 : vector<8x128xi1>, vector<8x128xf32>
    %c5_38 = arith.constant 5 : index
    %c0_39 = arith.constant 0 : index
    %c0_40 = arith.constant 0 : index
    %114 = vector.load %arg2[%c5_38, %c0_39, %c0_40] : memref<10x8x128xf32, #tpu.memory_space<vmem>>, vector<1x8x128xf32>
    %115 = vector.shape_cast %114 : vector<1x8x128xf32> to vector<8x128xf32>
    %116 = arith.mulf %113, %115 : vector<8x128xf32>
    %117 = arith.addf %109, %116 : vector<8x128xf32>
    %118 = arith.andi %26, %22 : vector<1x128xi1>
    %cst_41 = arith.constant 0.000000e+00 : f32
    %119 = vector.shape_cast %118 : vector<1x128xi1> to vector<1x128xi1>
    %120 = vector.broadcast %119 : vector<1x128xi1> to vector<8x128xi1>
    %121 = vector.broadcast %cst_41 : f32 to vector<8x128xf32>
    %122 = arith.select %120, %70, %121 : vector<8x128xi1>, vector<8x128xf32>
    %c6 = arith.constant 6 : index
    %c0_42 = arith.constant 0 : index
    %c0_43 = arith.constant 0 : index
    %123 = vector.load %arg2[%c6, %c0_42, %c0_43] : memref<10x8x128xf32, #tpu.memory_space<vmem>>, vector<1x8x128xf32>
    %124 = vector.shape_cast %123 : vector<1x8x128xf32> to vector<8x128xf32>
    %125 = arith.mulf %122, %124 : vector<8x128xf32>
    %126 = arith.addf %117, %125 : vector<8x128xf32>
    %cst_44 = arith.constant 0.000000e+00 : f32
    %127 = vector.shape_cast %26 : vector<1x128xi1> to vector<1x128xi1>
    %128 = vector.broadcast %127 : vector<1x128xi1> to vector<8x128xi1>
    %129 = vector.broadcast %cst_44 : f32 to vector<8x128xf32>
    %130 = arith.select %128, %71, %129 : vector<8x128xi1>, vector<8x128xf32>
    %c7 = arith.constant 7 : index
    %c0_45 = arith.constant 0 : index
    %c0_46 = arith.constant 0 : index
    %131 = vector.load %arg2[%c7, %c0_45, %c0_46] : memref<10x8x128xf32, #tpu.memory_space<vmem>>, vector<1x8x128xf32>
    %132 = vector.shape_cast %131 : vector<1x8x128xf32> to vector<8x128xf32>
    %133 = arith.mulf %130, %132 : vector<8x128xf32>
    %134 = arith.addf %126, %133 : vector<8x128xf32>
    %135 = arith.andi %26, %21 : vector<1x128xi1>
    %cst_47 = arith.constant 0.000000e+00 : f32
    %136 = vector.shape_cast %135 : vector<1x128xi1> to vector<1x128xi1>
    %137 = vector.broadcast %136 : vector<1x128xi1> to vector<8x128xi1>
    %138 = vector.broadcast %cst_47 : f32 to vector<8x128xf32>
    %139 = arith.select %137, %72, %138 : vector<8x128xi1>, vector<8x128xf32>
    %c8 = arith.constant 8 : index
    %c0_48 = arith.constant 0 : index
    %c0_49 = arith.constant 0 : index
    %140 = vector.load %arg2[%c8, %c0_48, %c0_49] : memref<10x8x128xf32, #tpu.memory_space<vmem>>, vector<1x8x128xf32>
    %141 = vector.shape_cast %140 : vector<1x8x128xf32> to vector<8x128xf32>
    %142 = arith.mulf %139, %141 : vector<8x128xf32>
    %143 = arith.addf %134, %142 : vector<8x128xf32>
    %c9 = arith.constant 9 : index
    %c0_50 = arith.constant 0 : index
    %c0_51 = arith.constant 0 : index
    %144 = vector.load %arg2[%c9, %c0_50, %c0_51] : memref<10x8x128xf32, #tpu.memory_space<vmem>>, vector<1x8x128xf32>
    %145 = vector.shape_cast %144 : vector<1x8x128xf32> to vector<8x128xf32>
    %146 = arith.addf %143, %145 : vector<8x128xf32>
    %cst_52 = arith.constant 0.000000e+00 : f32
    %147 = vector.broadcast %cst_52 : f32 to vector<8x128xf32>
    %148 = arith.maximumf %146, %147 : vector<8x128xf32>
    %c6_53 = arith.constant 6 : index
    %149 = memref.load %arg4[%c6_53] : memref<16xf32, #tpu.memory_space<smem>>
    %c7_54 = arith.constant 7 : index
    %150 = memref.load %arg4[%c7_54] : memref<16xf32, #tpu.memory_space<smem>>
    %c8_55 = arith.constant 8 : index
    %151 = memref.load %arg4[%c8_55] : memref<16xf32, #tpu.memory_space<smem>>
    %c9_56 = arith.constant 9 : index
    %152 = memref.load %arg4[%c9_56] : memref<16xf32, #tpu.memory_space<smem>>
    %c10 = arith.constant 10 : index
    %153 = memref.load %arg4[%c10] : memref<16xf32, #tpu.memory_space<smem>>
    %c11 = arith.constant 11 : index
    %154 = memref.load %arg4[%c11] : memref<16xf32, #tpu.memory_space<smem>>
    %c127_i32_57 = arith.constant 127 : i32
    %155 = tpu.dynamic_rotate %148 by %c127_i32_57 dim 1 : vector<8x128xf32>, i32 -> vector<8x128xf32>
    %c1_i32_58 = arith.constant 1 : i32
    %156 = tpu.dynamic_rotate %148 by %c1_i32_58 dim 1 : vector<8x128xf32>, i32 -> vector<8x128xf32>
    %157 = vector.shape_cast %21 : vector<1x128xi1> to vector<1x128xi1>
    %158 = vector.broadcast %157 : vector<1x128xi1> to vector<8x128xi1>
    %159 = arith.select %158, %155, %156 : vector<8x128xi1>, vector<8x128xf32>
    %160 = vector.broadcast %149 : f32 to vector<1x128xf32>
    %161 = vector.broadcast %152 : f32 to vector<1x128xf32>
    %162 = arith.select %21, %160, %161 : vector<1x128xi1>, vector<1x128xf32>
    %163 = vector.broadcast %150 : f32 to vector<1x128xf32>
    %164 = vector.broadcast %151 : f32 to vector<1x128xf32>
    %165 = arith.select %21, %163, %164 : vector<1x128xi1>, vector<1x128xf32>
    %166 = vector.broadcast %153 : f32 to vector<1x128xf32>
    %167 = vector.broadcast %154 : f32 to vector<1x128xf32>
    %168 = arith.select %21, %166, %167 : vector<1x128xi1>, vector<1x128xf32>
    %169 = vector.broadcast %162 : vector<1x128xf32> to vector<8x128xf32>
    %170 = arith.mulf %148, %169 : vector<8x128xf32>
    %171 = vector.broadcast %165 : vector<1x128xf32> to vector<8x128xf32>
    %172 = arith.mulf %159, %171 : vector<8x128xf32>
    %173 = arith.addf %170, %172 : vector<8x128xf32>
    %174 = vector.broadcast %168 : vector<1x128xf32> to vector<8x128xf32>
    %175 = arith.addf %173, %174 : vector<8x128xf32>
    %cst_59 = arith.constant dense<0.000000e+00> : vector<8x128xf32>
    %176 = tpu.matmul %175, %27, %cst_59 {dimension_numbers = #tpu.dot_dimension_numbers<[1], [0], [0], [1], [0, 0, 1, 1], [], []>} : vector<8x128xf32>, vector<128x128xf32>, vector<8x128xf32> -> vector<8x128xf32>
    %cst_60 = arith.constant 3.125000e-02 : f32
    %177 = vector.broadcast %cst_60 : f32 to vector<8x128xf32>
    %178 = arith.mulf %176, %177 : vector<8x128xf32>
    %179 = arith.subf %175, %178 : vector<8x128xf32>
    %180 = arith.mulf %179, %179 : vector<8x128xf32>
    %cst_61 = arith.constant dense<0.000000e+00> : vector<8x128xf32>
    %181 = tpu.matmul %180, %27, %cst_61 {dimension_numbers = #tpu.dot_dimension_numbers<[1], [0], [0], [1], [0, 0, 1, 1], [], []>} : vector<8x128xf32>, vector<128x128xf32>, vector<8x128xf32> -> vector<8x128xf32>
    %cst_62 = arith.constant 3.125000e-02 : f32
    %182 = vector.broadcast %cst_62 : f32 to vector<8x128xf32>
    %183 = arith.mulf %181, %182 : vector<8x128xf32>
    %cst_63 = arith.constant 9.99999974E-6 : f32
    %184 = vector.broadcast %cst_63 : f32 to vector<8x128xf32>
    %185 = arith.addf %183, %184 : vector<8x128xf32>
    %186 = math.rsqrt %185 : vector<8x128xf32>
    %187 = arith.mulf %179, %186 : vector<8x128xf32>
    %c127_i32_64 = arith.constant 127 : i32
    %188 = tpu.dynamic_rotate %187 by %c127_i32_64 dim 1 : vector<8x128xf32>, i32 -> vector<8x128xf32>
    %c1_i32_65 = arith.constant 1 : i32
    %189 = tpu.dynamic_rotate %187 by %c1_i32_65 dim 1 : vector<8x128xf32>, i32 -> vector<8x128xf32>
    %190 = vector.shape_cast %21 : vector<1x128xi1> to vector<1x128xi1>
    %191 = vector.broadcast %190 : vector<1x128xi1> to vector<8x128xi1>
    %192 = arith.select %191, %188, %189 : vector<8x128xi1>, vector<8x128xf32>
    %193 = arith.addf %187, %192 : vector<8x128xf32>
    %cst_66 = arith.constant 5.000000e-01 : f32
    %194 = vector.broadcast %cst_66 : f32 to vector<8x128xf32>
    %195 = arith.mulf %194, %193 : vector<8x128xf32>
    %c12 = arith.constant 12 : index
    %196 = memref.load %arg4[%c12] : memref<16xf32, #tpu.memory_space<smem>>
    %197 = vector.broadcast %196 : f32 to vector<8x128xf32>
    %198 = arith.mulf %195, %197 : vector<8x128xf32>
    %c13 = arith.constant 13 : index
    %199 = memref.load %arg4[%c13] : memref<16xf32, #tpu.memory_space<smem>>
    %200 = vector.broadcast %199 : f32 to vector<8x128xf32>
    %201 = arith.addf %198, %200 : vector<8x128xf32>
    %cst_67 = arith.constant 0.000000e+00 : f32
    %202 = vector.broadcast %cst_67 : f32 to vector<8x128xf32>
    %203 = arith.maximumf %201, %202 : vector<8x128xf32>
    %c14 = arith.constant 14 : index
    %204 = memref.load %arg4[%c14] : memref<16xf32, #tpu.memory_space<smem>>
    %205 = vector.broadcast %204 : f32 to vector<8x128xf32>
    %206 = arith.mulf %203, %205 : vector<8x128xf32>
    %c15 = arith.constant 15 : index
    %207 = memref.load %arg4[%c15] : memref<16xf32, #tpu.memory_space<smem>>
    %208 = vector.broadcast %207 : f32 to vector<8x128xf32>
    %209 = arith.addf %206, %208 : vector<8x128xf32>
    %210 = arith.negf %209 : vector<8x128xf32>
    %211 = math.exp %210 : vector<8x128xf32>
    %cst_68 = arith.constant 1.000000e+00 : f32
    %212 = vector.broadcast %cst_68 : f32 to vector<8x128xf32>
    %213 = arith.addf %212, %211 : vector<8x128xf32>
    %214 = arith.divf %212, %213 : vector<8x128xf32>
    %215 = arith.mulf %187, %214 : vector<8x128xf32>
    %216 = arith.addf %215, %0 : vector<8x128xf32>
    %c0_69 = arith.constant 0 : index
    %c0_70 = arith.constant 0 : index
    %217 = vector.load %arg5[%c0_69, %c0_70] : memref<8x128xf32, #tpu.memory_space<vmem>>, vector<8x128xf32>
    tpu.vector_store %arg5[%c0_69, %c0_70], %216 {strides = array<i32>} : memref<8x128xf32, #tpu.memory_space<vmem>>, vector<8x128xf32>,
    return
  }
  func.func @transform_0(%arg0: i32) -> (i32, i32) {
    %c0_i32 = arith.constant 0 : i32
    %c0_i32_0 = arith.constant 0 : i32
    return %arg0, %c0_i32 : i32, i32
  }
  func.func @transform_1(%arg0: i32) -> (i32, i32, i32) {
    %c0_i32 = arith.constant 0 : i32
    %c0_i32_0 = arith.constant 0 : i32
    %c0_i32_1 = arith.constant 0 : i32
    %c0_i32_2 = arith.constant 0 : i32
    return %c0_i32, %c0_i32_0, %c0_i32_1 : i32, i32, i32
  }
  func.func @transform_2(%arg0: i32) -> (i32, i32) {
    %c0_i32 = arith.constant 0 : i32
    %c0_i32_0 = arith.constant 0 : i32
    %c0_i32_1 = arith.constant 0 : i32
    return %c0_i32, %c0_i32_0 : i32, i32
  }
  func.func @transform_3(%arg0: i32) -> i32 {
    %c0_i32 = arith.constant 0 : i32
    %c0_i32_0 = arith.constant 0 : i32
    return %c0_i32 : i32
  }
  func.func @transform_4(%arg0: i32) -> (i32, i32) {
    %c0_i32 = arith.constant 0 : i32
    %c0_i32_0 = arith.constant 0 : i32
    return %arg0, %c0_i32 : i32, i32
  }
}

</mosaic_0001>

<llo_original>
// kernel: _lambda_.1
$region0: #{_lambda_.1}
  #allocation0 [shape = 'u32[]', space=smem, size = 0x4, offset = 0x4, fixed_abs, tag = 'smem constant byte address 0x4 - core index']
  #allocation1 [shape = 'u32[72,128]{1,0:T(1,128)}', space=vmem, size = 0x9000, scoped, tag = 'internal scratch']
  %s0 = inlined_call_operand.vmem [shape: f32[8,128], index: 0, kind: input, shape index: {}]
  %s1 = inlined_call_operand.vmem [shape: f32[10,8,128], index: 1, kind: input, shape index: {}]
  %s2 = inlined_call_operand.vmem [shape: f32[128,128], index: 2, kind: input, shape index: {}]
  %s3 = inlined_call_operand.vmem [shape: f32[16], index: 3, kind: input, shape index: {}]
  %s4 = inlined_call_operand.vmem [shape: f32[8,128], index: 4, kind: output, shape index: {}]
  %s5 = sld [smem:[#allocation0]]
  $region30: #{_lambda_.1} parent=0
    _
  %s7 = ssub.s32 1, %s5
  %s8 = scalar_select 0, %s7, %s5
  $region1: #{_lambda_.1} parent=0
    #allocation2 [shape = 'u8[512]{0}', space=smem, size = 0x200, scoped, tag = 'input window, operand 3, single buffered']
    #allocation3 [shape = 's32[1]{0}', space=sflag, size = 0x4, scoped, tag = 'scoped memory for _lambda_.1']
    %9 = vsyncpa [#allocation3], 0
    // Predicated region
    $region2: #{_lambda_.1} parent=1 // pred_check
      _
    $region3: #{_lambda_.1} parent=1 // pred_check_branch
      %11 = sbr.rel (0) target = $region5
    $region4: #{_lambda_.1} parent=1 // pred_region
      _
    $region5: #{_lambda_.1} parent=1 // pred_fallthru
      _
    // Predicated region
    $region6: #{_lambda_.1} parent=1 // pred_check
      _
    $region7: #{_lambda_.1} parent=1 // pred_check_branch
      %13 = sbr.rel (0) target = $region9
    $region8: #{_lambda_.1} parent=1 // pred_region
      _
    $region9: #{_lambda_.1} parent=1 // pred_fallthru
      _
    // Predicated region
    $region10: #{_lambda_.1} parent=1 // pred_check
      _
    $region11: #{_lambda_.1} parent=1 // pred_check_branch
      %15 = sbr.rel (0) target = $region13
    $region12: #{_lambda_.1} parent=1 // pred_region
      _
    $region13: #{_lambda_.1} parent=1 // pred_fallthru
      _
    // Predicated region
    $region14: #{_lambda_.1} parent=1 // pred_check
      _
    $region15: #{_lambda_.1} parent=1 // pred_check_branch
      %17 = sbr.rel (0) target = $region17
    $region16: #{_lambda_.1} parent=1 // pred_region
      %19 = vsyncadd [#allocation3], 0
      %s21 = sshll.u32 %s3, 4
      %s22 = int_to_ptr.vmem [resolvable:$true] %s21
      %24 = dma.vmem_to_smem %s22, 16, [#allocation2], [#allocation3]
    $region17: #{_lambda_.1} parent=1 // pred_fallthru
      _
    // Predicated region
    $region18: #{_lambda_.1} parent=1 // pred_check
      _
    $region19: #{_lambda_.1} parent=1 // pred_check_branch
      %26 = sbr.rel (0) target = $region21
    $region20: #{_lambda_.1} parent=1 // pred_region
      %28 = dma.done [#allocation3], 16
    $region21: #{_lambda_.1} parent=1 // pred_fallthru
      _
    %29 = sfence
    %v30 = vld [vmem:[%s0] sm:$0xff]
    %v31 = vlaneseq
    %v32 = vand.u32 %v31, 127
    %vm33 = vcmp.lt.s32.totalorder %v32, 0
    %v34 = vsub.s32 0, %v32
    %v35 = vsel %vm33, %v34, %v32
    %v36 = vshrl.u32 %v35, 5
    %v37 = vand.u32 %v35, 31
    %v38 = vsub.s32 0, %v37
    %v39 = vsel %vm33, %v38, %v37
    %vm40 = vcmp.ne.s32.totalorder %v39, 0
    %vm41 = vcmp.lt.s32.totalorder %v39, 0
    %vm42 = vmand %vm41, %vm40
    %v43 = vadd.s32 %v39, 32
    %v44 = vsel %vm42, %v43, %v39
    %v45 = vand.u32 %v44, 1
    %vm46 = vcmp.eq.s32.totalorder %v45, 0
    %vm47 = vmxor %vm46, 1
    %vm48 = vcmp.ge.s32.totalorder %v44, 2
    %vm49 = vcmp.lt.s32.totalorder %v44, 30
    %v50 = vld [vmem:[%s2] sm:$0xff]
    %v51 = vld [vmem:[%s2 + $0x8] sm:$0xff]
    %v52 = vld [vmem:[%s2 + $0x10] sm:$0xff]
    %v53 = vld [vmem:[%s2 + $0x18] sm:$0xff]
    %v54 = vld [vmem:[%s2 + $0x20] sm:$0xff]
    %v55 = vld [vmem:[%s2 + $0x28] sm:$0xff]
    %v56 = vld [vmem:[%s2 + $0x30] sm:$0xff]
    %v57 = vld [vmem:[%s2 + $0x38] sm:$0xff]
    %v58 = vld [vmem:[%s2 + $0x40] sm:$0xff]
    %v59 = vld [vmem:[%s2 + $0x48] sm:$0xff]
    %v60 = vld [vmem:[%s2 + $0x50] sm:$0xff]
    %v61 = vld [vmem:[%s2 + $0x58] sm:$0xff]
    %v62 = vld [vmem:[%s2 + $0x60] sm:$0xff]
    %v63 = vld [vmem:[%s2 + $0x68] sm:$0xff]
    %v64 = vld [vmem:[%s2 + $0x70] sm:$0xff]
    %v65 = vld [vmem:[%s2 + $0x78] sm:$0xff]
    %66 = vmatpush.msra.mxu0 %v65
    %67 = vmatpush.msra.mxu0 %v64
    %68 = vmatpush.msra.mxu0 %v63
    %69 = vmatpush.msra.mxu0 %v62
    %70 = vmatpush.msra.mxu0 %v61
    %71 = vmatpush.msra.mxu0 %v60
    %72 = vmatpush.msra.mxu0 %v59
    %73 = vmatpush.msra.mxu0 %v58
    %74 = vmatpush.msra.mxu0 %v57
    %75 = vmatpush.msra.mxu0 %v56
    %76 = vmatpush.msra.mxu0 %v55
    %77 = vmatpush.msra.mxu0 %v54
    %78 = vmatpush.msra.mxu0 %v53
    %79 = vmatpush.msra.mxu0 %v52
    %80 = vmatpush.msra.mxu0 %v51
    %81 = vmatpush.msra.mxu0 %v50
    %82 = vmatmul.f32.gmra.mxu0 %v30
    %v83 = vpop.f32.mrf.mxu0
    %v84 = vadd.f32 0.0, %v83
    %85 = vdwg.mxu0
    %v86 = vmul.f32 %v84, 0.03125
    %v87 = vsub.f32 %v30, %v86
    %v88 = vmul.f32 %v87, %v87
    %89 = vmatpush.msra.mxu0 %v65
    %90 = vmatpush.msra.mxu0 %v64
    %91 = vmatpush.msra.mxu0 %v63
    %92 = vmatpush.msra.mxu0 %v62
    %93 = vmatpush.msra.mxu0 %v61
    %94 = vmatpush.msra.mxu0 %v60
    %95 = vmatpush.msra.mxu0 %v59
    %96 = vmatpush.msra.mxu0 %v58
    %97 = vmatpush.msra.mxu0 %v57
    %98 = vmatpush.msra.mxu0 %v56
    %99 = vmatpush.msra.mxu0 %v55
    %100 = vmatpush.msra.mxu0 %v54
    %101 = vmatpush.msra.mxu0 %v53
    %102 = vmatpush.msra.mxu0 %v52
    %103 = vmatpush.msra.mxu0 %v51
    %104 = vmatpush.msra.mxu0 %v50
    %105 = vmatmul.f32.gmra.mxu0 %v88
    %v106 = vpop.f32.mrf.mxu0
    %v107 = vadd.f32 0.0, %v106
    %108 = vdwg.mxu0
    %v109 = vmul.f32 %v107, 0.03125
    %v110 = vadd.f32 %v109, 1e-05
    %v111 = vrsqrt.pop %v110
    %v112 = vmul.f32 %v111, %v110
    %v113 = vmul.f32 %v112, %v111
    %v114 = vmul.f32 0.5, %v113
    %v115 = vsub.f32 1.5, %v114
    %v116 = vmul.f32 %v111, %v115
    %vm117 = vweird.f32 %v110
    %vm118 = vweird.f32 %v111
    %vm119 = vmor %vm117, %vm118
    %v120 = vsel %vm119, %v111, %v116
    %v121 = vmul.f32 %v87, %v120
    %s122 = sld [smem:[#allocation2]]
    %s123 = sld [smem:[#allocation2 + $0x1]]
    %s124 = sld [smem:[#allocation2 + $0x2]]
    %s125 = sld [smem:[#allocation2 + $0x3]]
    %s126 = sld [smem:[#allocation2 + $0x4]]
    %s127 = sld [smem:[#allocation2 + $0x5]]
    %128 = vrot.lane.b32.xlu0 %v121, 127
    %v129 = vpop.permute.xlu0 %128
    %130 = vrot.lane.b32.xlu0 %v121, 1
    %v131 = vpop.permute.xlu0 %130
    %v132 = vsel %vm46, 1, 0
    %vm133 = vcmp.eq.s32.totalorder %v132, 1
    %v134 = vsel %vm133, %v129, %v131
    %v135 = vstv %s122
    %v136 = vstv %s125
    %v137 = vsel %vm46, %v135, %v136
    %v138 = vstv %s123
    %v139 = vstv %s124
    %v140 = vsel %vm46, %v138, %v139
    %v141 = vstv %s126
    %v142 = vstv %s127
    %v143 = vsel %vm46, %v141, %v142
    %v144 = vmul.f32 %v121, %v137
    %v145 = vmul.f32 %v134, %v140
    %v146 = vadd.f32 %v144, %v145
    %v147 = vadd.f32 %v146, %v143
    %148 = vrot.lane.b32.xlu0 %v147, 3
    %v149 = vpop.permute.xlu0 %148
    %150 = vrot.lane.b32.xlu0 %v147, 2
    %v151 = vpop.permute.xlu0 %150
    %152 = vrot.lane.b32.xlu0 %v147, 1
    %v153 = vpop.permute.xlu0 %152
    %154 = vrot.lane.b32.xlu0 %v147, 127
    %v155 = vpop.permute.xlu0 %154
    %156 = vrot.lane.b32.xlu0 %v147, 126
    %v157 = vpop.permute.xlu0 %156
    %158 = vrot.lane.b32.xlu0 %v147, 125
    %v159 = vpop.permute.xlu0 %158
    %s160 = scalar_lea.vmem %s1, 32
    %v161 = vld [vmem:[%s160] sm:$0xff]
    %v162 = vmul.f32 %v147, %v161
    %vm163 = vmand %vm48, %vm47
    %v164 = vsel %vm163, 1, 0
    %vm165 = vcmp.eq.s32.totalorder %v164, 1
    %v166 = vsel %vm165, %v149, 0.0
    %v167 = vld [vmem:[%s1] sm:$0xff]
    %v168 = vmul.f32 %v166, %v167
    %v169 = vadd.f32 %v162, %v168
    %v170 = vsel %vm48, 1, 0
    %vm171 = vcmp.eq.s32.totalorder %v170, 1
    %v172 = vsel %vm171, %v151, 0.0
    %s173 = scalar_lea.vmem %s1, 8
    %v174 = vld [vmem:[%s173] sm:$0xff]
    %v175 = vmul.f32 %v172, %v174
    %v176 = vadd.f32 %v169, %v175
    %vm177 = vmand %vm48, %vm46
    %v178 = vsel %vm177, 1, 0
    %vm179 = vcmp.eq.s32.totalorder %v178, 1
    %v180 = vsel %vm179, %v153, 0.0
    %s181 = scalar_lea.vmem %s1, 16
    %v182 = vld [vmem:[%s181] sm:$0xff]
    %v183 = vmul.f32 %v180, %v182
    %v184 = vadd.f32 %v176, %v183
    %v185 = vsel %vm47, 1, 0
    %vm186 = vcmp.eq.s32.totalorder %v185, 1
    %v187 = vsel %vm186, %v153, 0.0
    %s188 = scalar_lea.vmem %s1, 24
    %v189 = vld [vmem:[%s188] sm:$0xff]
    %v190 = vmul.f32 %v187, %v189
    %v191 = vadd.f32 %v184, %v190
    %v192 = vsel %vm133, %v155, 0.0
    %s193 = scalar_lea.vmem %s1, 40
    %v194 = vld [vmem:[%s193] sm:$0xff]
    %v195 = vmul.f32 %v192, %v194
    %v196 = vadd.f32 %v191, %v195
    %vm197 = vmand %vm49, %vm47
    %v198 = vsel %vm197, 1, 0
    %vm199 = vcmp.eq.s32.totalorder %v198, 1
    %v200 = vsel %vm199, %v155, 0.0
    %s201 = scalar_lea.vmem %s1, 48
    %v202 = vld [vmem:[%s201] sm:$0xff]
    %v203 = vmul.f32 %v200, %v202
    %v204 = vadd.f32 %v196, %v203
    %v205 = vsel %vm49, 1, 0
    %vm206 = vcmp.eq.s32.totalorder %v205, 1
    %v207 = vsel %vm206, %v157, 0.0
    %s208 = scalar_lea.vmem %s1, 56
    %v209 = vld [vmem:[%s208] sm:$0xff]
    %v210 = vmul.f32 %v207, %v209
    %v211 = vadd.f32 %v204, %v210
    %vm212 = vmand %vm49, %vm46
    %v213 = vsel %vm212, 1, 0
    %vm214 = vcmp.eq.s32.totalorder %v213, 1
    %v215 = vsel %vm214, %v159, 0.0
    %s216 = scalar_lea.vmem %s1, 64
    %v217 = vld [vmem:[%s216] sm:$0xff]
    %v218 = vmul.f32 %v215, %v217
    %v219 = vadd.f32 %v211, %v218
    %s220 = scalar_lea.vmem %s1, 72
    %v221 = vld [vmem:[%s220] sm:$0xff]
    %v222 = vadd.f32 %v219, %v221
    %v223 = vmax.f32 %v222, 0.0
    %s224 = sld [smem:[#allocation2 + $0x6]]
    %s225 = sld [smem:[#allocation2 + $0x7]]
    %s226 = sld [smem:[#allocation2 + $0x8]]
    %s227 = sld [smem:[#allocation2 + $0x9]]
    %s228 = sld [smem:[#allocation2 + $0xa]]
    %s229 = sld [smem:[#allocation2 + $0xb]]
    %230 = vrot.lane.b32.xlu0 %v223, 127
    %v231 = vpop.permute.xlu0 %230
    %232 = vrot.lane.b32.xlu0 %v223, 1
    %v233 = vpop.permute.xlu0 %232
    %v234 = vsel %vm133, %v231, %v233
    %v235 = vstv %s224
    %v236 = vstv %s227
    %v237 = vsel %vm46, %v235, %v236
    %v238 = vstv %s225
    %v239 = vstv %s226
    %v240 = vsel %vm46, %v238, %v239
    %v241 = vstv %s228
    %v242 = vstv %s229
    %v243 = vsel %vm46, %v241, %v242
    %v244 = vmul.f32 %v223, %v237
    %v245 = vmul.f32 %v234, %v240
    %v246 = vadd.f32 %v244, %v245
    %v247 = vadd.f32 %v246, %v243
    %248 = vmatpush.msra.mxu0 %v65
    %249 = vmatpush.msra.mxu0 %v64
    %250 = vmatpush.msra.mxu0 %v63
    %251 = vmatpush.msra.mxu0 %v62
    %252 = vmatpush.msra.mxu0 %v61
    %253 = vmatpush.msra.mxu0 %v60
    %254 = vmatpush.msra.mxu0 %v59
    %255 = vmatpush.msra.mxu0 %v58
    %256 = vmatpush.msra.mxu0 %v57
    %257 = vmatpush.msra.mxu0 %v56
    %258 = vmatpush.msra.mxu0 %v55
    %259 = vmatpush.msra.mxu0 %v54
    %260 = vmatpush.msra.mxu0 %v53
    %261 = vmatpush.msra.mxu0 %v52
    %262 = vmatpush.msra.mxu0 %v51
    %263 = vmatpush.msra.mxu0 %v50
    %264 = vmatmul.f32.gmra.mxu0 %v247
    %v265 = vpop.f32.mrf.mxu0
    %v266 = vadd.f32 0.0, %v265
    %267 = vdwg.mxu0
    %v268 = vmul.f32 %v266, 0.03125
    %v269 = vsub.f32 %v247, %v268
    %v270 = vmul.f32 %v269, %v269
    %271 = vmatpush.msra.mxu0 %v65
    %272 = vmatpush.msra.mxu0 %v64
    %273 = vmatpush.msra.mxu0 %v63
    %274 = vmatpush.msra.mxu0 %v62
    %275 = vmatpush.msra.mxu0 %v61
    %276 = vmatpush.msra.mxu0 %v60
    %277 = vmatpush.msra.mxu0 %v59
    %278 = vmatpush.msra.mxu0 %v58
    %279 = vmatpush.msra.mxu0 %v57
    %280 = vmatpush.msra.mxu0 %v56
    %281 = vmatpush.msra.mxu0 %v55
    %282 = vmatpush.msra.mxu0 %v54
    %283 = vmatpush.msra.mxu0 %v53
    %284 = vmatpush.msra.mxu0 %v52
    %285 = vmatpush.msra.mxu0 %v51
    %286 = vmatpush.msra.mxu0 %v50
    %287 = vmatmul.f32.gmra.mxu0 %v270
    %v288 = vpop.f32.mrf.mxu0
    %v289 = vadd.f32 0.0, %v288
    %290 = vdwg.mxu0
    %v291 = vmul.f32 %v289, 0.03125
    %v292 = vadd.f32 %v291, 1e-05
    %v293 = vrsqrt.pop %v292
    %v294 = vmul.f32 %v293, %v292
    %v295 = vmul.f32 %v294, %v293
    %v296 = vmul.f32 0.5, %v295
    %v297 = vsub.f32 1.5, %v296
    %v298 = vmul.f32 %v293, %v297
    %vm299 = vweird.f32 %v292
    %vm300 = vweird.f32 %v293
    %vm301 = vmor %vm299, %vm300
    %v302 = vsel %vm301, %v293, %v298
    %v303 = vmul.f32 %v269, %v302
    %304 = vrot.lane.b32.xlu0 %v303, 127
    %v305 = vpop.permute.xlu0 %304
    %306 = vrot.lane.b32.xlu0 %v303, 1
    %v307 = vpop.permute.xlu0 %306
    %v308 = vsel %vm133, %v305, %v307
    %v309 = vadd.f32 %v303, %v308
    %v310 = vmul.f32 %v309, 0.5
    %s311 = sld [smem:[#allocation2 + $0xc]]
    %v312 = vstv %s311
    %v313 = vmul.f32 %v310, %v312
    %s314 = sld [smem:[#allocation2 + $0xd]]
    %v315 = vstv %s314
    %v316 = vadd.f32 %v313, %v315
    %v317 = vmax.f32 %v316, 0.0
    %s318 = sld [smem:[#allocation2 + $0xe]]
    %v319 = vstv %s318
    %v320 = vmul.f32 %v317, %v319
    %s321 = sld [smem:[#allocation2 + $0xf]]
    %v322 = vstv %s321
    %v323 = vadd.f32 %v320, %v322
    %v324 = vxor.u32 %v323, 2147483648
    %v325 = vmul.f32 %v324, 1.442695
    %v326 = vpow.pop %v325
    %v327 = vadd.f32 %v326, 1.0
    %v328 = vrcp.pop %v327
    %v329 = vmul.f32 %v327, %v328
    %v330 = vsub.f32 1.0, %v329
    %v331 = vmul.f32 %v328, %v330
    %v332 = vadd.f32 %v328, %v331
    %vm333 = vweird.f32 %v327
    %vm334 = vweird.f32 %v328
    %vm335 = vmor %vm333, %vm334
    %v336 = vsel %vm335, %v328, %v332
    %v337 = vand.u32 2147483647, %v327
    %vm338 = vcmp.eq.f32.partialorder %v337, 8.507059e+37
    %v339 = vand.u32 %v327, 2147483648
    %v340 = vor.u32 1.1754944e-38, %v339
    %v341 = vsel %vm338, %v340, %v336
    %v342 = vmul.f32 1.0, %v341
    %v343 = vmul.f32 %v303, %v342
    %v344 = vadd.f32 %v343, %v30
    %345 = vst [vmem:[%s4] sm:$0xff] %v344
    // Predicated region
    $region22: #{_lambda_.1} parent=1 // pred_check
      _
    $region23: #{_lambda_.1} parent=1 // pred_check_branch
      %347 = sbr.rel (0) target = $region25
    $region24: #{_lambda_.1} parent=1 // pred_region
      _
    $region25: #{_lambda_.1} parent=1 // pred_fallthru
      _
    // Predicated region
    $region26: #{_lambda_.1} parent=1 // pred_check
      _
    $region27: #{_lambda_.1} parent=1 // pred_check_branch
      %349 = sbr.rel (0) target = $region29
    $region28: #{_lambda_.1} parent=1 // pred_region
      _
    $region29: #{_lambda_.1} parent=1 // pred_fallthru
      _
    %350 = vsyncpa [#allocation3], 1

</llo_original>
